<compile_context>
chip_gen: v7x
topology: tpu7x:2x2x1
jax: 0.10.0
libtpu: 0.0.40
codegen_flags: <defaults>
</compile_context>

<pallas_src>
import math
import jax
import jax.numpy as jnp
from jax.experimental import pallas as pl
from jax.experimental.pallas import tpu as pltpu


def _round_up(x, m):
    return ((x + m - 1) // m) * m


def _make_kernel(K: int, Cin: int, Ttile: int, T: int, eps: float = 1e-5):
    """Builds the kernel body.  K, Cin, Ttile, T are static Python ints."""
    pad = K // 2

    def _conv_post(xcols, w_ref, b_ref, g_ref, beta_ref, out_dtype):
        # Fused conv: single MXU contraction over K*Cin, native-dtype operands, f32 acc.
        acc = jnp.dot(w_ref[...], xcols, preferred_element_type=jnp.float32)  # (Cout, Ttile)
        acc = acc + b_ref[...].astype(jnp.float32)                            # conv bias
        acc = jnp.maximum(acc, 0.0)                                           # ReLU
        # LayerNorm over channels (axis 0), biased variance, eps = 1e-5.
        mean = jnp.mean(acc, axis=0, keepdims=True)
        var = jnp.mean((acc - mean) ** 2, axis=0, keepdims=True)
        normed = (acc - mean) * jax.lax.rsqrt(var + eps)
        out = normed * g_ref[...].astype(jnp.float32) + beta_ref[...].astype(jnp.float32)
        return out.astype(out_dtype)

    def kernel(x_ref, w_ref, b_ref, g_ref, beta_ref, o_ref, *scratch):
        # x_ref   : (1, Cin, Ttile)      current (non-overlapping) input time tile
        # w_ref   : (Cout, K*Cin)        fused conv weights, rows ordered (k, ci)
        # b_ref   : (Cout, 1)            conv bias
        # g_ref   : (Cout, 1)            layernorm gamma
        # beta_ref: (Cout, 1)            layernorm beta
        # o_ref   : (1, Cout, Ttile)
        # scratch : () or ((Cin, pad+Ttile) halo-carry VMEM,)
        j = pl.program_id(1)
        cur = x_ref[0]                                                        # (Cin, Ttile)

        # Zero time columns outside [0, T): supplies the conv's right-edge zero padding
        # and neutralizes garbage lanes of partial boundary blocks.
        col = jax.lax.broadcasted_iota(jnp.int32, (Cin, Ttile), 1) + j * Ttile
        cur_m = jnp.where(col < T, cur, jnp.zeros_like(cur))

        if pad == 0:
            # 1x1 conv: no halo, no carry, output tile j is computed at step j.
            o_ref[0] = _conv_post(cur_m, w_ref, b_ref, g_ref, beta_ref, o_ref.dtype)
            return

        carry_ref, = scratch  # holds [last `pad` cols of tile j-2 | tile j-1]

        @pl.when(j == 0)
        def _init_carry():
            # Left edge of this batch element: `pad` zero columns.
            carry_ref[...] = jnp.concatenate(
                [jnp.zeros((Cin, pad), cur_m.dtype), cur_m], axis=1)

        @pl.when(j > 0)
        def _compute_and_update():
            old_carry = carry_ref[...]                                        # (Cin, pad+Ttile)
            # Input columns [(j-1)*Ttile - pad, (j-1)*Ttile + Ttile + pad).
            window = jnp.concatenate([old_carry, cur_m[:, :pad]], axis=1)     # (Cin, Ttile+2p)
            # im2col over taps; row order (k, ci) matches the wrapper's weight reshape.
            xcols = jnp.concatenate(
                [window[:, k:k + Ttile] for k in range(K)], axis=0)           # (K*Cin, Ttile)
            o_ref[0] = _conv_post(xcols, w_ref, b_ref, g_ref, beta_ref, o_ref.dtype)
            # Slide the halo carry forward: [last `pad` cols of tile j-1 | tile j].
            carry_ref[...] = jnp.concatenate([old_carry[:, Ttile:], cur_m], axis=1)

    return kernel


def conv_relu_norm(signal, conv_w, conv_b, ln_g, ln_b, kernel_size, *,
                   time_tile=256, eps=1e-5):
    """
    signal : (B, Cin, T)   -- PyTorch NCT layout
    conv_w : (Cout, Cin, K)
    conv_b : (Cout,)
    ln_g   : (Cout,)
    ln_b   : (Cout,)
    returns (B, Cout, T)
    """
    B, Cin, T = signal.shape
    Cout, Cin_w, K = conv_w.shape
    if Cin_w != Cin or K != kernel_size:
        raise ValueError("conv weight shape does not match signal / kernel_size")
    if K % 2 == 0:
        # PyTorch Conv1d with padding=K//2 gives T+1 outputs for even K; unsupported.
        raise ValueError("conv_relu_norm Pallas kernel requires an odd kernel_size")
    if time_tile % 128 != 0:
        raise ValueError("time_tile must be a multiple of 128")
    pad = K // 2

    Ttile = min(time_tile, _round_up(T, 128))   # lane-dense tile, VMEM bounded by tile
    n_t = -(-T // Ttile)
    # pad > 0 needs one extra trailing grid step per batch to drain the halo carry.
    grid = (B, n_t + (1 if pad > 0 else 0))

    # (Cout, Cin, K) -> (Cout, K*Cin) with columns ordered (k, ci) to match the im2col.
    w2 = jnp.transpose(conv_w, (0, 2, 1)).reshape(Cout, K * Cin)
    b2 = conv_b.reshape(Cout, 1)
    g2 = ln_g.reshape(Cout, 1)
    beta2 = ln_b.reshape(Cout, 1)

    if pad > 0:
        # Output tile j-1 is produced at step j; the last step re-uses the final input
        # block (clamped index -> no extra DMA) with all of it masked to zero.
        x_idx = lambda b, j: (b, 0, jnp.minimum(j, n_t - 1))
        o_idx = lambda b, j: (b, 0, jnp.maximum(j - 1, 0))
        scratch = [pltpu.VMEM((Cin, pad + Ttile), signal.dtype)]
    else:
        x_idx = lambda b, j: (b, 0, j)
        o_idx = lambda b, j: (b, 0, j)
        scratch = []

    return pl.pallas_call(
        _make_kernel(K, Cin, Ttile, T, eps),
        out_shape=jax.ShapeDtypeStruct((B, Cout, T), signal.dtype),
        grid_spec=pltpu.PrefetchScalarGridSpec(
            num_scalar_prefetch=0,
            grid=grid,
            in_specs=[
                pl.BlockSpec((1, Cin, Ttile), x_idx),
                pl.BlockSpec((Cout, K * Cin), lambda b, j: (0, 0)),
                pl.BlockSpec((Cout, 1), lambda b, j: (0, 0)),
                pl.BlockSpec((Cout, 1), lambda b, j: (0, 0)),
                pl.BlockSpec((Cout, 1), lambda b, j: (0, 0)),
            ],
            out_specs=pl.BlockSpec((1, Cout, Ttile), o_idx),
            scratch_shapes=scratch,
        ),
        compiler_params=pltpu.CompilerParams(
            dimension_semantics=("parallel", "arbitrary"),
        ),
    )(signal, w2, b2, g2, beta2)


def _reference(signal, conv_w, conv_b, ln_g, ln_b, kernel_size, eps=1e-5):
    """Plain-JAX reference matching PyTorch semantics."""
    pad = kernel_size // 2
    out = jax.lax.conv_general_dilated(
        signal.astype(jnp.float32),
        conv_w.astype(jnp.float32),
        window_strides=(1,),
        padding=[(pad, pad)],
        dimension_numbers=("NCH", "OIH", "NCH"),
    ) + conv_b.reshape(1, -1, 1)
    out = jnp.maximum(out, 0.0)
    out_t = jnp.transpose(out, (0, 2, 1))          # (B, T, Cout)
    mean = jnp.mean(out_t, axis=-1, keepdims=True)
    var = jnp.mean((out_t - mean) ** 2, axis=-1, keepdims=True)
    normed = (out_t - mean) * jax.lax.rsqrt(var + eps)
    normed = normed * ln_g + ln_b
    return jnp.transpose(normed, (0, 2, 1)).astype(signal.dtype)


if __name__ == "__main__":
    key = jax.random.PRNGKey(0)

    def make_params(k, Cin, Cout, K):
        k_w, k_b, k_g, k_beta = jax.random.split(k, 4)
        fan_in = Cin * K
        bound = 1.0 / math.sqrt(fan_in)
        conv_w = jax.random.uniform(k_w, (Cout, Cin, K), minval=-bound, maxval=bound,
                                    dtype=jnp.float32)
        conv_b = jax.random.uniform(k_b, (Cout,), minval=-bound, maxval=bound,
                                    dtype=jnp.float32)
        ln_g = jnp.ones((Cout,), jnp.float32) + 0.01 * jax.random.normal(k_g, (Cout,))
        ln_b = 0.01 * jax.random.normal(k_beta, (Cout,))
        return conv_w, conv_b, ln_g, ln_b

    k1, k2, k3, k4 = jax.random.split(key, 4)

    # Config 1: small, single time tile (B=2, Cin=16, Cout=32, T=24, K=3).
    B, Cin, Cout, T, K = 2, 16, 32, 24, 3
    x = jax.random.normal(k1, (B, Cin, T), dtype=jnp.float32)
    params = make_params(k2, Cin, Cout, K)
    out = jax.block_until_ready(conv_relu_norm(x, *params, K, time_tile=128))
    ref = _reference(x, *params, K)
    assert out.shape == (B, Cout, T)
    assert jnp.allclose(out, ref, atol=1e-4, rtol=1e-4), "mismatch vs reference (config 1)"

    # Config 2: multiple time tiles with K=5 halo carry (T=300 -> 3 tiles of 128).
    B, Cin, Cout, T, K = 2, 16, 32, 300, 5
    x = jax.random.normal(k3, (B, Cin, T), dtype=jnp.float32)
    params = make_params(k2, Cin, Cout, K)
    out = jax.block_until_ready(conv_relu_norm(x, *params, K, time_tile=128))
    ref = _reference(x, *params, K)
    assert jnp.allclose(out, ref, atol=1e-4, rtol=1e-4), "mismatch vs reference (config 2)"

    # Config 3: module default kernel_size=1 (no halo path), partial final tile.
    B, Cin, Cout, T, K = 2, 8, 16, 130, 1
    x = jax.random.normal(k4, (B, Cin, T), dtype=jnp.float32)
    params = make_params(k2, Cin, Cout, K)
    out = jax.block_until_ready(conv_relu_norm(x, *params, K, time_tile=128))
    ref = _reference(x, *params, K)
    assert jnp.allclose(out, ref, atol=1e-4, rtol=1e-4), "mismatch vs reference (config 3)"

    print("KERNEL_OK")
</pallas_src>

<mosaic_0001>
module attributes {stable_mosaic.version = 11 : i64} {
  func.func @kernel(%arg0: i32, %arg1: i32, %arg2: memref<1x16x128xf32, #tpu.memory_space<vmem>>, %arg3: memref<32x48xf32, #tpu.memory_space<vmem>>, %arg4: memref<32x1xf32, #tpu.memory_space<vmem>>, %arg5: memref<32x1xf32, #tpu.memory_space<vmem>>, %arg6: memref<32x1xf32, #tpu.memory_space<vmem>>, %arg7: memref<1x32x128xf32, #tpu.memory_space<vmem>>, %arg8: memref<16x129xf32, #tpu.memory_space<vmem>>) attributes {dimension_semantics = [#tpu.dimension_semantics<parallel>, #tpu.dimension_semantics<arbitrary>], iteration_bounds = array<i64: 2, 2>, scalar_prefetch = 0 : i64, scratch_operands = 1 : i64, tpu.core_type = #tpu.core_type<tc>, window_params = [{transform_indices = @transform_0, window_bounds = array<i64: 1, 16, 128>}, {pipeline_mode = #tpu.pipeline_mode<synchronous>, transform_indices = @transform_1, window_bounds = array<i64: 32, 48>}, {pipeline_mode = #tpu.pipeline_mode<synchronous>, transform_indices = @transform_2, window_bounds = array<i64: 32, 1>}, {pipeline_mode = #tpu.pipeline_mode<synchronous>, transform_indices = @transform_3, window_bounds = array<i64: 32, 1>}, {pipeline_mode = #tpu.pipeline_mode<synchronous>, transform_indices = @transform_4, window_bounds = array<i64: 32, 1>}, {transform_indices = @transform_5, window_bounds = array<i64: 1, 32, 128>}]} {
    %c0 = arith.constant 0 : index
    %c0_0 = arith.constant 0 : index
    %c0_1 = arith.constant 0 : index
    %0 = vector.load %arg2[%c0, %c0_0, %c0_1] : memref<1x16x128xf32, #tpu.memory_space<vmem>>, vector<1x16x128xf32>
    %1 = vector.shape_cast %0 : vector<1x16x128xf32> to vector<16x128xf32>
    %2 = tpu.iota {dimensions = array<i32: 1>} : vector<16x128xi32>
    %c128_i32 = arith.constant 128 : i32
    %3 = arith.muli %arg1, %c128_i32 : i32
    %4 = vector.broadcast %3 : i32 to vector<16x128xi32>
    %5 = arith.addi %2, %4 : vector<16x128xi32>
    %c24_i32 = arith.constant 24 : i32
    %6 = vector.broadcast %c24_i32 : i32 to vector<16x128xi32>
    %7 = arith.cmpi slt, %5, %6 : vector<16x128xi32>
    %cst = arith.constant 0.000000e+00 : f32
    %8 = vector.broadcast %cst : f32 to vector<16x128xf32>
    %9 = arith.select %7, %1, %8 : vector<16x128xi1>, vector<16x128xf32>
    %c0_i32 = arith.constant 0 : i32
    %10 = arith.cmpi eq, %arg1, %c0_i32 : i32
    %11 = arith.extui %10 : i1 to i32
    %c0_i32_2 = arith.constant 0 : i32
    %12 = arith.cmpi ne, %11, %c0_i32_2 : i32
    scf.if %12 {
      %cst_5 = arith.constant 0.000000e+00 : f32
      %16 = vector.broadcast %cst_5 : f32 to vector<16x1xf32>
      %17 = tpu.concatenate %16, %9 in 1 : vector<16x1xf32>, vector<16x128xf32> -> vector<16x129xf32>
      %c0_6 = arith.constant 0 : index
      %c0_7 = arith.constant 0 : index
      %18 = vector.load %arg8[%c0_6, %c0_7] : memref<16x129xf32, #tpu.memory_space<vmem>>, vector<16x129xf32>
      tpu.vector_store %arg8[%c0_6, %c0_7], %17 {strides = array<i32>} : memref<16x129xf32, #tpu.memory_space<vmem>>, vector<16x129xf32>,
    } else {
    }
    %c0_i32_3 = arith.constant 0 : i32
    %13 = arith.cmpi sgt, %arg1, %c0_i32_3 : i32
    %14 = arith.extui %13 : i1 to i32
    %c0_i32_4 = arith.constant 0 : i32
    %15 = arith.cmpi ne, %14, %c0_i32_4 : i32
    scf.if %15 {
      %c0_5 = arith.constant 0 : index
      %c0_6 = arith.constant 0 : index
      %16 = vector.load %arg8[%c0_5, %c0_6] : memref<16x129xf32, #tpu.memory_space<vmem>>, vector<16x129xf32>
      %17 = vector.extract_strided_slice %9 {offsets = [0, 0], sizes = [16, 1], strides = [1, 1]} : vector<16x128xf32> to vector<16x1xf32>
      %18 = tpu.concatenate %16, %17 in 1 : vector<16x129xf32>, vector<16x1xf32> -> vector<16x130xf32>
      %19 = vector.extract_strided_slice %18 {offsets = [0, 0], sizes = [16, 128], strides = [1, 1]} : vector<16x130xf32> to vector<16x128xf32>
      %20 = vector.extract_strided_slice %18 {offsets = [0, 1], sizes = [16, 128], strides = [1, 1]} : vector<16x130xf32> to vector<16x128xf32>
      %21 = vector.extract_strided_slice %18 {offsets = [0, 2], sizes = [16, 128], strides = [1, 1]} : vector<16x130xf32> to vector<16x128xf32>
      %22 = tpu.concatenate %19, %20, %21 in 0 : vector<16x128xf32>, vector<16x128xf32>, vector<16x128xf32> -> vector<48x128xf32>
      %c0_7 = arith.constant 0 : index
      %c0_8 = arith.constant 0 : index
      %23 = vector.load %arg3[%c0_7, %c0_8] : memref<32x48xf32, #tpu.memory_space<vmem>>, vector<32x48xf32>
      %cst_9 = arith.constant dense<0.000000e+00> : vector<32x128xf32>
      %24 = tpu.matmul %23, %22, %cst_9 {dimension_numbers = #tpu.dot_dimension_numbers<[1], [0], [0], [1], [0, 0, 1, 1], [], []>} : vector<32x48xf32>, vector<48x128xf32>, vector<32x128xf32> -> vector<32x128xf32>
      %c0_10 = arith.constant 0 : index
      %c0_11 = arith.constant 0 : index
      %25 = vector.load %arg4[%c0_10, %c0_11] : memref<32x1xf32, #tpu.memory_space<vmem>>, vector<32x1xf32>
      %26 = vector.broadcast %25 : vector<32x1xf32> to vector<32x128xf32>
      %27 = arith.addf %24, %26 : vector<32x128xf32>
      %cst_12 = arith.constant 0.000000e+00 : f32
      %28 = vector.broadcast %cst_12 : f32 to vector<32x128xf32>
      %29 = arith.maximumf %27, %28 : vector<32x128xf32>
      %cst_13 = arith.constant dense<0.000000e+00> : vector<128xf32>
      %30 = vector.multi_reduction <add>, %29, %cst_13 [0] : vector<32x128xf32> to vector<128xf32>
      %31 = vector.shape_cast %30 : vector<128xf32> to vector<1x128xf32>
      %cst_14 = arith.constant 3.200000e+01 : f32
      %32 = vector.broadcast %cst_14 : f32 to vector<1x128xf32>
      %33 = arith.divf %31, %32 : vector<1x128xf32>
      %34 = vector.broadcast %33 : vector<1x128xf32> to vector<32x128xf32>
      %35 = arith.subf %29, %34 : vector<32x128xf32>
      %36 = arith.mulf %35, %35 : vector<32x128xf32>
      %cst_15 = arith.constant dense<0.000000e+00> : vector<128xf32>
      %37 = vector.multi_reduction <add>, %36, %cst_15 [0] : vector<32x128xf32> to vector<128xf32>
      %38 = vector.shape_cast %37 : vector<128xf32> to vector<1x128xf32>
      %cst_16 = arith.constant 3.200000e+01 : f32
      %39 = vector.broadcast %cst_16 : f32 to vector<1x128xf32>
      %40 = arith.divf %38, %39 : vector<1x128xf32>
      %41 = vector.broadcast %33 : vector<1x128xf32> to vector<32x128xf32>
      %42 = arith.subf %29, %41 : vector<32x128xf32>
      %cst_17 = arith.constant 9.99999974E-6 : f32
      %43 = vector.broadcast %cst_17 : f32 to vector<1x128xf32>
      %44 = arith.addf %40, %43 : vector<1x128xf32>
      %45 = math.rsqrt %44 : vector<1x128xf32>
      %46 = vector.broadcast %45 : vector<1x128xf32> to vector<32x128xf32>
      %47 = arith.mulf %42, %46 : vector<32x128xf32>
      %c0_18 = arith.constant 0 : index
      %c0_19 = arith.constant 0 : index
      %48 = vector.load %arg5[%c0_18, %c0_19] : memref<32x1xf32, #tpu.memory_space<vmem>>, vector<32x1xf32>
      %49 = vector.broadcast %48 : vector<32x1xf32> to vector<32x128xf32>
      %50 = arith.mulf %47, %49 : vector<32x128xf32>
      %c0_20 = arith.constant 0 : index
      %c0_21 = arith.constant 0 : index
      %51 = vector.load %arg6[%c0_20, %c0_21] : memref<32x1xf32, #tpu.memory_space<vmem>>, vector<32x1xf32>
      %52 = vector.broadcast %51 : vector<32x1xf32> to vector<32x128xf32>
      %53 = arith.addf %50, %52 : vector<32x128xf32>
      %c0_22 = arith.constant 0 : index
      %c0_23 = arith.constant 0 : index
      %c0_24 = arith.constant 0 : index
      %54 = vector.load %arg7[%c0_22, %c0_23, %c0_24] : memref<1x32x128xf32, #tpu.memory_space<vmem>>, vector<1x32x128xf32>
      %55 = vector.shape_cast %54 : vector<1x32x128xf32> to vector<32x128xf32>
      %56 = vector.shape_cast %53 : vector<32x128xf32> to vector<1x32x128xf32>
      tpu.vector_store %arg7[%c0_22, %c0_23, %c0_24], %56 {strides = array<i32>} : memref<1x32x128xf32, #tpu.memory_space<vmem>>, vector<1x32x128xf32>,
      %57 = vector.extract_strided_slice %16 {offsets = [0, 128], sizes = [16, 1], strides = [1, 1]} : vector<16x129xf32> to vector<16x1xf32>
      %58 = tpu.concatenate %57, %9 in 1 : vector<16x1xf32>, vector<16x128xf32> -> vector<16x129xf32>
      %c0_25 = arith.constant 0 : index
      %c0_26 = arith.constant 0 : index
      %59 = vector.load %arg8[%c0_25, %c0_26] : memref<16x129xf32, #tpu.memory_space<vmem>>, vector<16x129xf32>
      tpu.vector_store %arg8[%c0_25, %c0_26], %58 {strides = array<i32>} : memref<16x129xf32, #tpu.memory_space<vmem>>, vector<16x129xf32>,
    } else {
    }
    return
  }
  func.func @transform_0(%arg0: i32, %arg1: i32) -> (i32, i32, i32) {
    %c0_i32 = arith.constant 0 : i32
    %0 = arith.minsi %arg1, %c0_i32 : i32
    %c0_i32_0 = arith.constant 0 : i32
    %c0_i32_1 = arith.constant 0 : i32
    return %arg0, %c0_i32_0, %0 : i32, i32, i32
  }
  func.func @transform_1(%arg0: i32, %arg1: i32) -> (i32, i32) {
    %c0_i32 = arith.constant 0 : i32
    %c0_i32_0 = arith.constant 0 : i32
    %c0_i32_1 = arith.constant 0 : i32
    return %c0_i32, %c0_i32_0 : i32, i32
  }
  func.func @transform_2(%arg0: i32, %arg1: i32) -> (i32, i32) {
    %c0_i32 = arith.constant 0 : i32
    %c0_i32_0 = arith.constant 0 : i32
    %c0_i32_1 = arith.constant 0 : i32
    return %c0_i32, %c0_i32_0 : i32, i32
  }
  func.func @transform_3(%arg0: i32, %arg1: i32) -> (i32, i32) {
    %c0_i32 = arith.constant 0 : i32
    %c0_i32_0 = arith.constant 0 : i32
    %c0_i32_1 = arith.constant 0 : i32
    return %c0_i32, %c0_i32_0 : i32, i32
  }
  func.func @transform_4(%arg0: i32, %arg1: i32) -> (i32, i32) {
    %c0_i32 = arith.constant 0 : i32
    %c0_i32_0 = arith.constant 0 : i32
    %c0_i32_1 = arith.constant 0 : i32
    return %c0_i32, %c0_i32_0 : i32, i32
  }
  func.func @transform_5(%arg0: i32, %arg1: i32) -> (i32, i32, i32) {
    %c1_i32 = arith.constant 1 : i32
    %0 = arith.subi %arg1, %c1_i32 : i32
    %c0_i32 = arith.constant 0 : i32
    %1 = arith.maxsi %0, %c0_i32 : i32
    %c0_i32_0 = arith.constant 0 : i32
    %c0_i32_1 = arith.constant 0 : i32
    return %arg0, %c0_i32_0, %1 : i32, i32, i32
  }
}

</mosaic_0001>

<llo_original>
// kernel: tpu_custom_call.1
$region0: #{tpu_custom_call.1}
  #allocation0 [shape = 'u32[]', space=smem, size = 0x4, offset = 0x4, fixed_abs, tag = 'smem constant byte address 0x4 - core index']
  #allocation1 [shape = 'u32[144,128]{1,0:T(1,128)}', space=vmem, size = 0x12000, scoped, tag = 'internal scratch']
  #allocation2 [shape = 'f32[16,129]{1,0:T(8,128)}', space=vmem, size = 0x4000, scoped, tag = 'scratch operand']
  %s0 = inlined_call_operand.vmem [shape: f32[2,16,24], index: 0, kind: input, shape index: {}]
  %s1 = inlined_call_operand.vmem [shape: f32[32,48], index: 1, kind: input, shape index: {}]
  %s2 = inlined_call_operand.vmem [shape: f32[32,1], index: 2, kind: input, shape index: {}]
  %s3 = inlined_call_operand.vmem [shape: f32[32,1], index: 3, kind: input, shape index: {}]
  %s4 = inlined_call_operand.vmem [shape: f32[32,1], index: 4, kind: input, shape index: {}]
  %s5 = inlined_call_operand.vmem [shape: f32[2,32,24], index: 5, kind: output, shape index: {}]
  %s6 = sld [smem:[#allocation0]]
  $region61: #{tpu_custom_call.1} parent=0
    _
  %s8 = ssub.s32 1, %s6
  %s9 = scalar_select 0, %s8, %s6
  loop: start=0, step=1, limit=6
  $region2: #{tpu_custom_call.1} parent=0 // loop_pre_header
    _
  $region3: #{tpu_custom_call.1} parent=0 // loop_header
    %s11 = sphi 0, %s15
    %p12 = scmp.ge.s32.totalorder %s11, 6
    %s18 = sphi 0, %s30
    %s19 = sphi 0, %s26
    %s20 = sphi 0, %s18
    %s21 = sphi 0, %s19
    %s22 = sphi 0, %s20
    %s23 = sphi 0, %s21
    %s39 = sphi 0, %s41
    %s42 = sphi 0, %s39
    %s43 = sphi 0, %s42
    %s59 = sphi 0, %s43
    %s63 = sphi 0, %s63
    %s65 = sphi 0, %s63
    %s66 = sphi 0, %s65
    %s80 = sphi 0, %s66
    %s84 = sphi 0, %s84
    %s86 = sphi 0, %s84
    %s87 = sphi 0, %s86
    %s101 = sphi 0, %s87
    %s105 = sphi 0, %s105
    %s107 = sphi 0, %s105
    %s108 = sphi 0, %s107
    %s122 = sphi 0, %s108
    %s126 = sphi 0, %s126
    %s128 = sphi 0, %s126
    %s129 = sphi 0, %s128
    %s143 = sphi 0, %s129
    %s157 = sphi 0, %s159
    %s160 = sphi 0, %s157
    %s161 = sphi 0, %s160
    %s177 = sphi 0, %s161
  $region4: #{tpu_custom_call.1} parent=0 // loop_header_branch
    %14 = sbr.rel (%p12) target = $region8
  $region5: #{tpu_custom_call.1} parent=0 // loop_body
    %s16 = ssub.s32 %s11, 1
    %s17 = ssub.s32 %s11, 2
    %s24 = sadd.s32 1, %s19
    %p25 = scmp.ge.s32.totalorder %s24, 2
    %s26 = scalar_select %p25, 0, %s24
    %s27 = sadd.s32 1, %s18
    %s28 = scalar_select %p25, %s27, %s18
    %p29 = scmp.ge.s32.totalorder %s28, 2
    %s30 = scalar_select %p29, 0, %s28
    %p31 = scmp.lt.s32.totalorder %s19, 0
    %s32 = scalar_select %p31, %s19, 0
    %p33 = scmp.lt.s32.totalorder %s26, 0
    %s34 = scalar_select %p33, %s26, 0
    %s35 = ssub.s32 %s18, %s30
    %s36 = ssub.s32 %s32, %s34
    %s37 = sor.u32 %s35, %s36
    %p38 = scmp.eq.s32.totalorder %s37, 0
    %s40 = sadd.s32 %s39, 1
    %s41 = scalar_select %p38, %s39, %s40
    %p44 = pneg %p38
    %p45 = scmp.eq.s32.totalorder %s11, 3
    %p46 = por %p44, %p45
    %p47 = scmp.ne.s32.totalorder %s39, %s42
    %p48 = scmp.eq.s32.totalorder %s11, 0
    %p49 = por %p47, %p48
    %p50 = scmp.ne.s32.totalorder %s39, %s42
    %p51 = scmp.eq.s32.totalorder %s16, 3
    %p52 = por %p50, %p51
    %p53 = scmp.ne.s32.totalorder %s42, %s43
    %p54 = scmp.eq.s32.totalorder %s16, 0
    %p55 = por %p53, %p54
    %p56 = scmp.ne.s32.totalorder %s42, %s43
    %p57 = scmp.eq.s32.totalorder %s17, 3
    %p58 = por %p56, %p57
    %p60 = scmp.ne.s32.totalorder %s43, %s59
    %p61 = scmp.eq.s32.totalorder %s17, 0
    %p62 = por %p60, %p61
    %s64 = sadd.s32 %s63, 1
    %p67 = scmp.eq.s32.totalorder %s11, 3
    %p68 = scmp.ne.s32.totalorder %s63, %s65
    %p69 = scmp.eq.s32.totalorder %s11, 0
    %p70 = por %p68, %p69
    %p71 = scmp.ne.s32.totalorder %s63, %s65
    %p72 = scmp.eq.s32.totalorder %s16, 3
    %p73 = por %p71, %p72
    %p74 = scmp.ne.s32.totalorder %s65, %s66
    %p75 = scmp.eq.s32.totalorder %s16, 0
    %p76 = por %p74, %p75
    %p77 = scmp.ne.s32.totalorder %s65, %s66
    %p78 = scmp.eq.s32.totalorder %s17, 3
    %p79 = por %p77, %p78
    %p81 = scmp.ne.s32.totalorder %s66, %s80
    %p82 = scmp.eq.s32.totalorder %s17, 0
    %p83 = por %p81, %p82
    %s85 = sadd.s32 %s84, 1
    %p88 = scmp.eq.s32.totalorder %s11, 3
    %p89 = scmp.ne.s32.totalorder %s84, %s86
    %p90 = scmp.eq.s32.totalorder %s11, 0
    %p91 = por %p89, %p90
    %p92 = scmp.ne.s32.totalorder %s84, %s86
    %p93 = scmp.eq.s32.totalorder %s16, 3
    %p94 = por %p92, %p93
    %p95 = scmp.ne.s32.totalorder %s86, %s87
    %p96 = scmp.eq.s32.totalorder %s16, 0
    %p97 = por %p95, %p96
    %p98 = scmp.ne.s32.totalorder %s86, %s87
    %p99 = scmp.eq.s32.totalorder %s17, 3
    %p100 = por %p98, %p99
    %p102 = scmp.ne.s32.totalorder %s87, %s101
    %p103 = scmp.eq.s32.totalorder %s17, 0
    %p104 = por %p102, %p103
    %s106 = sadd.s32 %s105, 1
    %p109 = scmp.eq.s32.totalorder %s11, 3
    %p110 = scmp.ne.s32.totalorder %s105, %s107
    %p111 = scmp.eq.s32.totalorder %s11, 0
    %p112 = por %p110, %p111
    %p113 = scmp.ne.s32.totalorder %s105, %s107
    %p114 = scmp.eq.s32.totalorder %s16, 3
    %p115 = por %p113, %p114
    %p116 = scmp.ne.s32.totalorder %s107, %s108
    %p117 = scmp.eq.s32.totalorder %s16, 0
    %p118 = por %p116, %p117
    %p119 = scmp.ne.s32.totalorder %s107, %s108
    %p120 = scmp.eq.s32.totalorder %s17, 3
    %p121 = por %p119, %p120
    %p123 = scmp.ne.s32.totalorder %s108, %s122
    %p124 = scmp.eq.s32.totalorder %s17, 0
    %p125 = por %p123, %p124
    %s127 = sadd.s32 %s126, 1
    %p130 = scmp.eq.s32.totalorder %s11, 3
    %p131 = scmp.ne.s32.totalorder %s126, %s128
    %p132 = scmp.eq.s32.totalorder %s11, 0
    %p133 = por %p131, %p132
    %p134 = scmp.ne.s32.totalorder %s126, %s128
    %p135 = scmp.eq.s32.totalorder %s16, 3
    %p136 = por %p134, %p135
    %p137 = scmp.ne.s32.totalorder %s128, %s129
    %p138 = scmp.eq.s32.totalorder %s16, 0
    %p139 = por %p137, %p138
    %p140 = scmp.ne.s32.totalorder %s128, %s129
    %p141 = scmp.eq.s32.totalorder %s17, 3
    %p142 = por %p140, %p141
    %p144 = scmp.ne.s32.totalorder %s129, %s143
    %p145 = scmp.eq.s32.totalorder %s17, 0
    %p146 = por %p144, %p145
    %s147 = ssub.s32 %s19, 1
    %p148 = scmp.gt.s32.totalorder %s147, 0
    %s149 = scalar_select %p148, %s147, 0
    %s150 = ssub.s32 %s26, 1
    %p151 = scmp.gt.s32.totalorder %s150, 0
    %s152 = scalar_select %p151, %s150, 0
    %s153 = ssub.s32 %s18, %s30
    %s154 = ssub.s32 %s149, %s152
    %s155 = sor.u32 %s153, %s154
    %p156 = scmp.eq.s32.totalorder %s155, 0
    %s158 = sadd.s32 %s157, 1
    %s159 = scalar_select %p156, %s157, %s158
    %p162 = pneg %p156
    %p163 = scmp.eq.s32.totalorder %s11, 3
    %p164 = por %p162, %p163
    %p165 = scmp.ne.s32.totalorder %s157, %s160
    %p166 = scmp.eq.s32.totalorder %s11, 0
    %p167 = por %p165, %p166
    %p168 = scmp.ne.s32.totalorder %s157, %s160
    %p169 = scmp.eq.s32.totalorder %s16, 3
    %p170 = por %p168, %p169
    %p171 = scmp.ne.s32.totalorder %s160, %s161
    %p172 = scmp.eq.s32.totalorder %s16, 0
    %p173 = por %p171, %p172
    %p174 = scmp.ne.s32.totalorder %s160, %s161
    %p175 = scmp.eq.s32.totalorder %s17, 3
    %p176 = por %p174, %p175
    %p178 = scmp.ne.s32.totalorder %s161, %s177
    %p179 = scmp.eq.s32.totalorder %s17, 0
    %p180 = por %p178, %p179
    %p181 = scmp.le.s32.totalorder 1, %s11
    %p182 = scmp.lt.s32.totalorder %s11, 5
    %p183 = pnand %p181, %p182
    %p184 = pneg %p183
    // Predicated region
    $region9: #{tpu_custom_call.1} parent=5 // pred_check
      _
    $region10: #{tpu_custom_call.1} parent=5 // pred_check_branch
      %186 = sbr.rel (%p183) target = $region12
    $region11: #{tpu_custom_call.1} parent=5 // pred_region
      %s187 = ssub.s32 %s11, 1
      // Predicated region
      $region13: #{tpu_custom_call.1} parent=11 // pred_check
        %p188 = pneg %p76
      $region14: #{tpu_custom_call.1} parent=11 // pred_check_branch
        %190 = sbr.rel (%p188) target = $region16
      $region15: #{tpu_custom_call.1} parent=11 // pred_region
        _
      $region16: #{tpu_custom_call.1} parent=11 // pred_fallthru
        _
      // Predicated region
      $region17: #{tpu_custom_call.1} parent=11 // pred_check
        %p191 = pneg %p97
      $region18: #{tpu_custom_call.1} parent=11 // pred_check_branch
        %193 = sbr.rel (%p191) target = $region20
      $region19: #{tpu_custom_call.1} parent=11 // pred_region
        _
      $region20: #{tpu_custom_call.1} parent=11 // pred_fallthru
        _
      // Predicated region
      $region21: #{tpu_custom_call.1} parent=11 // pred_check
        %p194 = pneg %p118
      $region22: #{tpu_custom_call.1} parent=11 // pred_check_branch
        %196 = sbr.rel (%p194) target = $region24
      $region23: #{tpu_custom_call.1} parent=11 // pred_region
        _
      $region24: #{tpu_custom_call.1} parent=11 // pred_fallthru
        _
      // Predicated region
      $region25: #{tpu_custom_call.1} parent=11 // pred_check
        %p197 = pneg %p139
      $region26: #{tpu_custom_call.1} parent=11 // pred_check_branch
        %199 = sbr.rel (%p197) target = $region28
      $region27: #{tpu_custom_call.1} parent=11 // pred_region
        _
      $region28: #{tpu_custom_call.1} parent=11 // pred_fallthru
        _
    $region12: #{tpu_custom_call.1} parent=5 // pred_fallthru
      _
    %p200 = scmp.lt.s32.totalorder %s11, 4
    // Predicated region
    $region29: #{tpu_custom_call.1} parent=5 // pred_check
      %p201 = pneg %p200
    $region30: #{tpu_custom_call.1} parent=5 // pred_check_branch
      %203 = sbr.rel (%p201) target = $region32
    $region31: #{tpu_custom_call.1} parent=5 // pred_region
      // Predicated region
      $region33: #{tpu_custom_call.1} parent=31 // pred_check
        %p204 = pneg %p49
      $region34: #{tpu_custom_call.1} parent=31 // pred_check_branch
        %206 = sbr.rel (%p204) target = $region36
      $region35: #{tpu_custom_call.1} parent=31 // pred_region
        %p207 = scmp.lt.s32.totalorder %s19, 0
        %s208 = scalar_select %p207, %s19, 0
        %p209 = scmp.lt.s32.totalorder %s18, 1
        %s210 = scalar_select %p209, %s18, 1
        %p211 = scmp.lt.s32.totalorder %s208, 0
        %s212 = scalar_select %p211, %s208, 0
        %s213 = smul.addr %s210, 2
        %s214 = sadd.s32 %s212, %s213
        %s215 = smul.addr %s214, 8
        %s216 = scalar_lea.vmem %s0, %s215
        %p217 = scmp.lt.s32.totalorder %s19, 0
        %s218 = scalar_select %p217, %s19, 0
      $region36: #{tpu_custom_call.1} parent=31 // pred_fallthru
        _
    $region32: #{tpu_custom_call.1} parent=5 // pred_fallthru
      _
    %p219 = scmp.le.s32.totalorder 1, %s11
    %p220 = scmp.lt.s32.totalorder %s11, 5
    %p221 = pnand %p219, %p220
    %p222 = pneg %p221
    // Predicated region
    $region37: #{tpu_custom_call.1} parent=5 // pred_check
      _
    $region38: #{tpu_custom_call.1} parent=5 // pred_check_branch
      %224 = sbr.rel (%p221) target = $region40
    $region39: #{tpu_custom_call.1} parent=5 // pred_region
      %s225 = ssub.s32 %s11, 1
      %p226 = scmp.lt.s32.totalorder %s21, 0
      %s227 = scalar_select %p226, %s21, 0
      %p228 = scmp.lt.s32.totalorder %s20, 1
      %s229 = scalar_select %p228, %s20, 1
      %p230 = scmp.lt.s32.totalorder %s227, 0
      %s231 = scalar_select %p230, %s227, 0
      %s232 = smul.addr %s229, 2
      %s233 = sadd.s32 %s231, %s232
      %s234 = smul.addr %s233, 8
      %s235 = scalar_lea.vmem %s0, %s234
      %p236 = pneg %p55
      %p237 = pneg %p52
      %p238 = pneg %p76
      %p239 = pneg %p73
      %p240 = pneg %p97
      %p241 = pneg %p94
      %p242 = pneg %p118
      %p243 = pneg %p115
      %p244 = pneg %p139
      %p245 = pneg %p136
      %p246 = pneg %p173
      %p247 = pneg %p170
      %s248 = ssub.s32 %s21, 1
      %p249 = scmp.gt.s32.totalorder %s248, 0
      %s250 = scalar_select %p249, %s248, 0
      %p251 = scmp.lt.s32.totalorder %s20, 1
      %s252 = scalar_select %p251, %s20, 1
      %p253 = scmp.lt.s32.totalorder %s250, 0
      %s254 = scalar_select %p253, %s250, 0
      %s255 = smul.addr %s252, 4
      %s256 = sadd.s32 %s254, %s255
      %s257 = smul.addr %s256, 8
      %s258 = scalar_lea.vmem %s5, %s257
      %p259 = scmp.lt.s32.totalorder %s21, 0
      %s260 = scalar_select %p259, %s21, 0
      %p261 = scmp.lt.s32.totalorder %s20, 1
      %s262 = scalar_select %p261, %s20, 1
      %p263 = scmp.lt.s32.totalorder %s260, 0
      %s264 = scalar_select %p263, %s260, 0
      %s265 = smul.addr %s262, 2
      %s266 = sadd.s32 %s264, %s265
      %s267 = smul.addr %s266, 8
      %s268 = scalar_lea.vmem %s0, %s267
      %p269 = scmp.lt.s32.totalorder %s21, 0
      %s270 = scalar_select %p269, %s21, 0
      %s271 = ssub.s32 %s21, 1
      %p272 = scmp.gt.s32.totalorder %s271, 0
      %s273 = scalar_select %p272, %s271, 0
      %p274 = scmp.lt.s32.totalorder %s20, 1
      %s275 = scalar_select %p274, %s20, 1
      %p276 = scmp.lt.s32.totalorder %s273, 0
      %s277 = scalar_select %p276, %s273, 0
      %s278 = smul.addr %s275, 4
      %s279 = sadd.s32 %s277, %s278
      %s280 = smul.addr %s279, 8
      %s281 = scalar_lea.vmem %s5, %s280
      %s282 = ssub.s32 %s21, 1
      %p283 = scmp.gt.s32.totalorder %s282, 0
      %s284 = scalar_select %p283, %s282, 0
      %v285 = vld [vmem:[%s268] sm:$0xff]
      %v286 = vld [vmem:[%s268 + $0x8] sm:$0xff]
      %v287 = vlaneseq
      %v288 = vand.u32 %v287, 127
      %s289 = smul.u32 %s21, 128
      %v290 = vstv %s289
      %v291 = vadd.s32 %v288, %v290
      %vm292 = vcmp.lt.s32.totalorder %v291, 24
      %v293 = vsel %vm292, %v285, 0.0
      %v294 = vsel %vm292, %v286, 0.0
      %p295 = scmp.eq.s32.totalorder %s21, 0
      // Predicated region
      $region41: #{tpu_custom_call.1} parent=39 // pred_check
        %p296 = pneg %p295
      $region42: #{tpu_custom_call.1} parent=39 // pred_check_branch
        %298 = sbr.rel (%p296) target = $region44
      $region43: #{tpu_custom_call.1} parent=39 // pred_region
        %301 = vrot.lane.b32.xlu0 %v293, 1
        %v302 = vpop.permute.xlu0 %301
        %303 = vrot.lane.b32.xlu0 %v294, 1
        %v304 = vpop.permute.xlu0 %303
        %vm307 = vcmask 7168
        %v308 = vsel %vm307, 0.0, %v302
        %v309 = vsel %vm307, 0.0, %v304
        %310 = vst [vmem:[#allocation2] sm:$0xff] %v308
        %311 = vst.msk [vmem:[#allocation2 + $0x8] sm:$0xff] %vm307, %v302
        %312 = vst [vmem:[#allocation2 + $0x10] sm:$0xff] %v309
        %313 = vst.msk [vmem:[#allocation2 + $0x18] sm:$0xff] %vm307, %v304
      $region44: #{tpu_custom_call.1} parent=39 // pred_fallthru
        _
      %p314 = scmp.gt.s32.totalorder %s21, 0
      // Predicated region
      $region45: #{tpu_custom_call.1} parent=39 // pred_check
        %p315 = pneg %p314
      $region46: #{tpu_custom_call.1} parent=39 // pred_check_branch
        %317 = sbr.rel (%p315) target = $region48
      $region47: #{tpu_custom_call.1} parent=39 // pred_region
        %v318 = vld [vmem:[#allocation2] sm:$0xff]
        %v319 = vld [vmem:[#allocation2 + $0x8] sm:$0xff]
        %v320 = vld [vmem:[#allocation2 + $0x10] sm:$0xff]
        %v321 = vld [vmem:[#allocation2 + $0x18] sm:$0xff]
        %324 = vrot.lane.b32.xlu0 %v293, 1
        %v325 = vpop.permute.xlu0 %324
        %326 = vrot.lane.b32.xlu0 %v294, 1
        %v327 = vpop.permute.xlu0 %326
        %vm330 = vcmask 7168
        %v331 = vsel %vm330, %v319, %v325
        %v332 = vsel %vm330, %v321, %v327
        %337 = vrot.lane.b32.xlu0 %v318, 127
        %v338 = vpop.permute.xlu0 %337
        %339 = vrot.lane.b32.xlu0 %v331, 127
        %v340 = vpop.permute.xlu0 %339
        %341 = vrot.lane.b32.xlu0 %v320, 127
        %v342 = vpop.permute.xlu0 %341
        %343 = vrot.lane.b32.xlu0 %v332, 127
        %v344 = vpop.permute.xlu0 %343
        %vm345 = vcmask 1039360
        %v346 = vsel %vm345, %v338, %v340
        %v347 = vsel %vm345, %v342, %v344
        %350 = vrot.lane.b32.xlu0 %v318, 126
        %v351 = vpop.permute.xlu0 %350
        %352 = vrot.lane.b32.xlu0 %v331, 126
        %v353 = vpop.permute.xlu0 %352
        %354 = vrot.lane.b32.xlu0 %v320, 126
        %v355 = vpop.permute.xlu0 %354
        %356 = vrot.lane.b32.xlu0 %v332, 126
        %v357 = vpop.permute.xlu0 %356
        %vm358 = vcmask 1031168
        %v359 = vsel %vm358, %v351, %v353
        %v360 = vsel %vm358, %v355, %v357
        %v363 = vld [vmem:[%s1] sm:$0xff]
        %v364 = vld [vmem:[%s1 + $0x8] sm:$0xff]
        %v365 = vld [vmem:[%s1 + $0x10] sm:$0xff]
        %v366 = vld [vmem:[%s1 + $0x18] sm:$0xff]
        %v367 = vld [vmem:[%s2] sm:$0xff]
        %v368 = vld [vmem:[%s2 + $0x8] sm:$0xff]
        %v369 = vld [vmem:[%s2 + $0x10] sm:$0xff]
        %v370 = vld [vmem:[%s2 + $0x18] sm:$0xff]
        %372 = vset.pattern.permute.xlu0 0
        %373 = vperm.xlu0 %372, %v367
        %v374 = vpop.permute.xlu0 %373
        %377 = vset.pattern.permute.xlu0 0
        %378 = vperm.xlu0 %377, %v368
        %v379 = vpop.permute.xlu0 %378
        %382 = vset.pattern.permute.xlu0 0
        %383 = vperm.xlu0 %382, %v369
        %v384 = vpop.permute.xlu0 %383
        %387 = vset.pattern.permute.xlu0 0
        %388 = vperm.xlu0 %387, %v370
        %v389 = vpop.permute.xlu0 %388
        %vm391 = vcmask 392192
        %v393 = vsel %vm391, %v363, 0
        %v396 = vsel %vm391, %v364, 0
        %v399 = vsel %vm391, %v365, 0
        %v402 = vsel %vm391, %v366, 0
        %404 = vmatprep.subr.mxu0 0.0
        %405 = vmatpush1.msra.mxu0 %v318
        %406 = vmatprep.subr.mxu0 0.0
        %407 = vmatpush1.msra.mxu0 %v320
        %408 = vmatprep.subr.mxu0 0.0
        %409 = vmatpush1.msra.mxu0 %v346
        %410 = vmatprep.subr.mxu0 0.0
        %411 = vmatpush1.msra.mxu0 %v347
        %412 = vmatprep.subr.mxu0 0.0
        %413 = vmatpush1.msra.mxu0 %v359
        %414 = vmatprep.subr.mxu0 0.0
        %415 = vmatpush1.msra.mxu0 %v360
        %416 = vmatprep.subr.mxu0 0.0
        %417 = vmatpush1.msra.mxu0 0.0
        %418 = vmatprep.subr.mxu0 0.0
        %419 = vmatpush1.msra.mxu0 0.0
        %420 = vmatprep.subr.mxu0 0.0
        %421 = vmatpush1.msra.mxu0 0.0
        %422 = vmatprep.subr.mxu0 0.0
        %423 = vmatpush1.msra.mxu0 0.0
        %424 = vmatprep.subr.mxu0 0.0
        %425 = vmatpush1.msra.mxu0 0.0
        %426 = vmatprep.subr.mxu0 0.0
        %427 = vmatpush1.msra.mxu0 0.0
        %428 = vmatprep.subr.mxu0 0.0
        %429 = vmatpush1.msra.mxu0 0.0
        %430 = vmatprep.subr.mxu0 0.0
        %431 = vmatpush1.msra.mxu0 0.0
        %432 = vmatprep.subr.mxu0 0.0
        %433 = vmatpush1.msra.mxu0 0.0
        %434 = vmatprep.subr.mxu0 0.0
        %435 = vmatpush1.msra.mxu0 0.0
        %436 = vmatprep.subr.mxu0 0.0
        %437 = vmatpush1.msra.mxu0 0.0
        %438 = vmatprep.subr.mxu0 0.0
        %439 = vmatpush1.msra.mxu0 0.0
        %440 = vmatprep.subr.mxu0 0.0
        %441 = vmatpush1.msra.mxu0 0.0
        %442 = vmatprep.subr.mxu0 0.0
        %443 = vmatpush1.msra.mxu0 0.0
        %444 = vmatprep.subr.mxu0 0.0
        %445 = vmatpush1.msra.mxu0 0.0
        %446 = vmatprep.subr.mxu0 0.0
        %447 = vmatpush1.msra.mxu0 0.0
        %448 = vmatprep.subr.mxu0 0.0
        %449 = vmatpush1.msra.mxu0 0.0
        %450 = vmatprep.subr.mxu0 0.0
        %451 = vmatpush1.msra.mxu0 0.0
        %452 = vmatprep.subr.mxu0 0.0
        %453 = vmatpush1.msra.mxu0 0.0
        %454 = vmatprep.subr.mxu0 0.0
        %455 = vmatpush1.msra.mxu0 0.0
        %456 = vmatprep.subr.mxu0 0.0
        %457 = vmatpush1.msra.mxu0 0.0
        %458 = vmatprep.subr.mxu0 0.0
        %459 = vmatpush1.msra.mxu0 0.0
        %460 = vmatprep.subr.mxu0 0.0
        %461 = vmatpush1.msra.mxu0 0.0
        %462 = vmatprep.subr.mxu0 0.0
        %463 = vmatpush1.msra.mxu0 0.0
        %464 = vmatprep.subr.mxu0 0.0
        %465 = vmatpush1.msra.mxu0 0.0
        %466 = vmatprep.subr.mxu0 0.0
        %467 = vmatpush1.msra.mxu0 0.0
        %468 = vmatprep.mubr.f32.mxu0 0.0
        %469 = vmatmul.mubr.f32.gmra.mrb[0].mxu0 %v393
        %v470 = vpop.f32.mrb[0].mxu0
        %v471 = vadd.f32 %v374, %v470
        %v472 = vpop.f32.mrb[0].mxu0
        %473 = vmatprep.mubr.f32.mxu0 0.0
        %474 = vmatmul.mubr.f32.gmra.mrb[0].mxu0 %v396
        %v475 = vpop.f32.mrb[0].mxu0
        %v476 = vadd.f32 %v379, %v475
        %v477 = vpop.f32.mrb[0].mxu0
        %478 = vmatprep.mubr.f32.mxu0 0.0
        %479 = vmatmul.mubr.f32.gmra.mrb[0].mxu0 %v399
        %v480 = vpop.f32.mrb[0].mxu0
        %v481 = vadd.f32 %v384, %v480
        %v482 = vpop.f32.mrb[0].mxu0
        %483 = vmatprep.mubr.f32.mxu0 0.0
        %484 = vmatmul.mubr.f32.gmra.mrb[0].mxu0 %v402
        %v485 = vpop.f32.mrb[0].mxu0
        %v486 = vadd.f32 %v389, %v485
        %v487 = vpop.f32.mrb[0].mxu0
        %488 = vdwg.mxu0
        %v489 = vmax.f32 %v471, 0.0
        %v490 = vmax.f32 %v476, 0.0
        %v491 = vmax.f32 %v481, 0.0
        %v492 = vmax.f32 %v486, 0.0
        %v493 = vadd.f32 %v489, %v490
        %v494 = vadd.f32 %v493, %v491
        %v495 = vadd.f32 %v494, %v492
        %v496 = vrot.slane %v495, 4
        %v497 = vadd.f32 %v495, %v496
        %v498 = vrot.slane %v497, 2
        %v499 = vadd.f32 %v497, %v498
        %v500 = vrot.slane %v499, 1
        %v501 = vadd.f32 %v499, %v500
        %v502 = vrcp.pop 32.0
        %v503 = vmul.f32 %v501, %v502
        %v504 = vsub.f32 %v489, %v503
        %v505 = vsub.f32 %v490, %v503
        %v506 = vsub.f32 %v491, %v503
        %v507 = vsub.f32 %v492, %v503
        %v508 = vmul.f32 %v504, %v504
        %v509 = vmul.f32 %v505, %v505
        %v510 = vmul.f32 %v506, %v506
        %v511 = vmul.f32 %v507, %v507
        %v512 = vadd.f32 %v508, %v509
        %v513 = vadd.f32 %v512, %v510
        %v514 = vadd.f32 %v513, %v511
        %v515 = vrot.slane %v514, 4
        %v516 = vadd.f32 %v514, %v515
        %v517 = vrot.slane %v516, 2
        %v518 = vadd.f32 %v516, %v517
        %v519 = vrot.slane %v518, 1
        %v520 = vadd.f32 %v518, %v519
        %v521 = vmul.f32 %v520, %v502
        %v522 = vadd.f32 %v521, 1e-05
        %v523 = vrsqrt.pop %v522
        %v524 = vmul.f32 %v504, %v523
        %v525 = vmul.f32 %v505, %v523
        %v526 = vmul.f32 %v506, %v523
        %v527 = vmul.f32 %v507, %v523
        %v528 = vld [vmem:[%s3] sm:$0xff]
        %v529 = vld [vmem:[%s3 + $0x8] sm:$0xff]
        %v530 = vld [vmem:[%s3 + $0x10] sm:$0xff]
        %v531 = vld [vmem:[%s3 + $0x18] sm:$0xff]
        %533 = vset.pattern.permute.xlu0 0
        %534 = vperm.xlu0 %533, %v528
        %v535 = vpop.permute.xlu0 %534
        %538 = vset.pattern.permute.xlu0 0
        %539 = vperm.xlu0 %538, %v529
        %v540 = vpop.permute.xlu0 %539
        %543 = vset.pattern.permute.xlu0 0
        %544 = vperm.xlu0 %543, %v530
        %v545 = vpop.permute.xlu0 %544
        %548 = vset.pattern.permute.xlu0 0
        %549 = vperm.xlu0 %548, %v531
        %v550 = vpop.permute.xlu0 %549
        %v552 = vmul.f32 %v524, %v535
        %v553 = vmul.f32 %v525, %v540
        %v554 = vmul.f32 %v526, %v545
        %v555 = vmul.f32 %v527, %v550
        %v556 = vld [vmem:[%s4] sm:$0xff]
        %v557 = vld [vmem:[%s4 + $0x8] sm:$0xff]
        %v558 = vld [vmem:[%s4 + $0x10] sm:$0xff]
        %v559 = vld [vmem:[%s4 + $0x18] sm:$0xff]
        %561 = vset.pattern.permute.xlu0 0
        %562 = vperm.xlu0 %561, %v556
        %v563 = vpop.permute.xlu0 %562
        %566 = vset.pattern.permute.xlu0 0
        %567 = vperm.xlu0 %566, %v557
        %v568 = vpop.permute.xlu0 %567
        %571 = vset.pattern.permute.xlu0 0
        %572 = vperm.xlu0 %571, %v558
        %v573 = vpop.permute.xlu0 %572
        %576 = vset.pattern.permute.xlu0 0
        %577 = vperm.xlu0 %576, %v559
        %v578 = vpop.permute.xlu0 %577
        %v580 = vadd.f32 %v552, %v563
        %v581 = vadd.f32 %v553, %v568
        %v582 = vadd.f32 %v554, %v573
        %v583 = vadd.f32 %v555, %v578
        %584 = vst [vmem:[%s281] sm:$0xff] %v580
        %585 = vst [vmem:[%s281 + $0x8] sm:$0xff] %v581
        %586 = vst [vmem:[%s281 + $0x10] sm:$0xff] %v582
        %587 = vst [vmem:[%s281 + $0x18] sm:$0xff] %v583
        %588 = vst [vmem:[#allocation2] sm:$0xff] %v331
        %589 = vst.msk [vmem:[#allocation2 + $0x8] sm:$0xff] %vm330, %v325
        %590 = vst [vmem:[#allocation2 + $0x10] sm:$0xff] %v332
        %591 = vst.msk [vmem:[#allocation2 + $0x18] sm:$0xff] %vm330, %v327
      $region48: #{tpu_custom_call.1} parent=39 // pred_fallthru
        _
      %s592 = ssub.s32 %s21, 1
      %p593 = scmp.gt.s32.totalorder %s592, 0
      %s594 = scalar_select %p593, %s592, 0
      %p595 = scmp.lt.s32.totalorder %s20, 1
      %s596 = scalar_select %p595, %s20, 1
      %p597 = scmp.lt.s32.totalorder %s594, 0
      %s598 = scalar_select %p597, %s594, 0
      %s599 = smul.addr %s596, 4
      %s600 = sadd.s32 %s598, %s599
      %s601 = smul.addr %s600, 8
      %s602 = scalar_lea.vmem %s5, %s601
      // Predicated region
      $region49: #{tpu_custom_call.1} parent=39 // pred_check
        %p603 = pneg %p170
      $region50: #{tpu_custom_call.1} parent=39 // pred_check_branch
        %605 = sbr.rel (%p603) target = $region52
      $region51: #{tpu_custom_call.1} parent=39 // pred_region
        %s606 = ssub.s32 %s21, 1
        %p607 = scmp.gt.s32.totalorder %s606, 0
        %s608 = scalar_select %p607, %s606, 0
      $region52: #{tpu_custom_call.1} parent=39 // pred_fallthru
        _
    $region40: #{tpu_custom_call.1} parent=5 // pred_fallthru
      _
    %p609 = scmp.le.s32.totalorder 2, %s11
    // Predicated region
    $region53: #{tpu_custom_call.1} parent=5 // pred_check
      %p610 = pneg %p609
    $region54: #{tpu_custom_call.1} parent=5 // pred_check_branch
      %612 = sbr.rel (%p610) target = $region56
    $region55: #{tpu_custom_call.1} parent=5 // pred_region
      %s613 = ssub.s32 %s11, 2
      // Predicated region
      $region57: #{tpu_custom_call.1} parent=55 // pred_check
        %p614 = pneg %p176
      $region58: #{tpu_custom_call.1} parent=55 // pred_check_branch
        %616 = sbr.rel (%p614) target = $region60
      $region59: #{tpu_custom_call.1} parent=55 // pred_region
        %s617 = ssub.s32 %s23, 1
        %p618 = scmp.gt.s32.totalorder %s617, 0
        %s619 = scalar_select %p618, %s617, 0
        %p620 = scmp.lt.s32.totalorder %s22, 1
        %s621 = scalar_select %p620, %s22, 1
        %p622 = scmp.lt.s32.totalorder %s619, 0
        %s623 = scalar_select %p622, %s619, 0
        %s624 = smul.addr %s621, 4
        %s625 = sadd.s32 %s623, %s624
        %s626 = smul.addr %s625, 8
        %s627 = scalar_lea.vmem %s5, %s626
      $region60: #{tpu_custom_call.1} parent=55 // pred_fallthru
        _
    $region56: #{tpu_custom_call.1} parent=5 // pred_fallthru
      _
  $region6: #{tpu_custom_call.1} parent=0 // loop_footer
    %s15 = sadd.s32 1, %s11
  $region7: #{tpu_custom_call.1} parent=0 // loop_footer_branch
    %10 = sbr.rel target = $region3
  $region8: #{tpu_custom_call.1} parent=0 // loop_exit
    _

</llo_original>
